<compile_context>
chip_gen: v7x
topology: tpu7x:2x2x1
jax: 0.10.0
libtpu: 0.0.40
codegen_flags: <defaults>
</compile_context>

<pallas_src>
import math

import jax
import jax.numpy as jnp
from jax.experimental import pallas as pl
from jax.experimental.pallas import tpu as pltpu


def _cdiv(a, b):
    return -(-a // b)


def _dct_matrix(n_pts):
    # D[n, k] = 2 * cos(pi * (2n + 1) * k / (2N))   so that  dct(x) = x @ D.
    # Always built in float32: the DCT basis accuracy must not follow x.dtype.
    n = jnp.arange(n_pts, dtype=jnp.float32)[:, None]
    k = jnp.arange(n_pts, dtype=jnp.float32)[None, :]
    return 2.0 * jnp.cos(math.pi * (2.0 * n + 1.0) * k / (2.0 * n_pts))


def _dct2d_kernel(x_ref, dht_ref, dwp_ref, o_ref):
    # x_ref:   (TB, H, G*W)  TB lane-packed groups (G images side by side)
    # dht_ref: (H, H)        D_H^T (shared by every lane column)
    # dwp_ref: (G*W, G*W)    block-diagonal kron(I_G, D_W)
    tb, h, gw = x_ref.shape

    # ---- W-pass: fold (TB, H) into the matmul M dim -> one big 2-D matmul.
    x2d = x_ref[...].reshape(tb * h, gw)
    t = jnp.dot(x2d, dwp_ref[...], preferred_element_type=jnp.float32)
    t = t.reshape(tb, h, gw)

    # ---- H-pass: batched matmul with the shared D_H^T; output stays in the
    # lane-dense (TB, H, G*W) layout so the store is an unmasked full-lane vst.
    o = jnp.matmul(dht_ref[...], t, preferred_element_type=jnp.float32)
    o_ref[...] = o.astype(o_ref.dtype)


def dct_2d(x, *, target_tile_bytes=2 * 1024 * 1024):
    """2-D DCT-II (norm=None); semantics identical to DCT_2D.forward (NCHW)."""
    N, C, H, W = x.shape
    B = N * C
    out_dtype = x.dtype

    # Lane packing factor: G images per 128-lane row (G = 1 if W >= 128 or W
    # does not divide 128).
    G = 128 // W if (W < 128 and 128 % W == 0) else 1
    GW = G * W

    NG = _cdiv(B, G)                       # number of lane-packed groups
    bytes_per_group = H * GW * 4           # f32 bytes of one group in VMEM
    TB = max(1, min(NG, target_tile_bytes // bytes_per_group))
    if NG >= 2:                            # keep >= 2 grid steps for megacore
        TB = min(TB, _cdiv(NG, 2))
    n_steps = _cdiv(NG, TB)
    NGp = n_steps * TB
    Bp = NGp * G

    # Pack: (B, H, W) -> zero-pad batch -> (NGp, H, G*W); image g of a group
    # occupies lanes [g*W, (g+1)*W).  (Wrapper-side layout plumbing only.)
    xb = x.reshape(B, H, W).astype(jnp.float32)
    if Bp != B:
        xb = jnp.pad(xb, ((0, Bp - B), (0, 0), (0, 0)))
    xp = xb.reshape(NGp, G, H, W).transpose(0, 2, 1, 3).reshape(NGp, H, GW)

    # DCT bases (float32).  Packed D_W is block-diagonal with exact zeros off
    # the diagonal blocks, so packed images cannot leak into each other.
    d_ht = _dct_matrix(H).T                                   # (H, H) = D_H^T
    d_w = _dct_matrix(W)                                      # (W, W)
    d_wp = jnp.kron(jnp.eye(G, dtype=jnp.float32), d_w) if G > 1 else d_w

    # Advisory cost for the XLA scheduler around the custom call.
    flops = 2 * NGp * H * GW * (GW + H)
    bytes_accessed = (2 * NGp * H * GW + n_steps * (H * H + GW * GW)) * 4
    cost = pl.CostEstimate(flops=flops, transcendentals=0,
                           bytes_accessed=bytes_accessed)

    # VMEM budget: double-buffered in/out tiles + the (grid-invariant) bases.
    # Note: for very large H/W the invariant D matrices should be single-
    # buffered (pl.Buffered(1) / scratch preload) to free VMEM for a larger TB;
    # negligible at these sizes so the default pipeline is kept.
    vmem_need = 4 * TB * H * GW * 4 + 2 * (H * H + GW * GW) * 4
    vmem_limit = int(min(48 * 1024 * 1024, max(32 * 1024 * 1024, 2 * vmem_need)))

    out = pl.pallas_call(
        _dct2d_kernel,
        out_shape=jax.ShapeDtypeStruct((NGp, H, GW), jnp.float32),
        grid_spec=pltpu.PrefetchScalarGridSpec(
            num_scalar_prefetch=0,
            grid=(n_steps,),
            in_specs=[
                pl.BlockSpec((TB, H, GW), lambda b: (b, 0, 0)),
                pl.BlockSpec((H, H), lambda b: (0, 0)),
                pl.BlockSpec((GW, GW), lambda b: (0, 0)),
            ],
            out_specs=pl.BlockSpec((TB, H, GW), lambda b: (b, 0, 0)),
        ),
        compiler_params=pltpu.CompilerParams(
            dimension_semantics=("parallel",),
            vmem_limit_bytes=vmem_limit,
        ),
        cost_estimate=cost,
    )(xp, d_ht, d_wp)

    # Unpack: (NGp, H, G*W) -> (Bp, H, W) -> (N, C, H, W), drop batch padding.
    out = out.reshape(NGp, H, G, W).transpose(0, 2, 1, 3).reshape(Bp, H, W)
    return out[:B].reshape(N, C, H, W).astype(out_dtype)


def _dct2d_reference(x):
    # Pure-JAX reference of the same math (silent sanity check).
    d_w = _dct_matrix(x.shape[-1])
    d_ht = _dct_matrix(x.shape[-2]).T
    return jnp.einsum("mh,nchw,wk->ncmk", d_ht, x.astype(jnp.float32),
                      d_w).astype(x.dtype)


if __name__ == "__main__":
    key = jax.random.PRNGKey(0)
    x = jax.random.normal(key, (2, 4, 16, 16), dtype=jnp.float32)

    y = dct_2d(x)
    jax.block_until_ready(y)

    y_ref = _dct2d_reference(x)
    assert y.shape == x.shape and y.dtype == x.dtype
    assert jnp.allclose(y, y_ref, rtol=1e-4, atol=1e-4), "mismatch vs reference"

    print("KERNEL_OK")
</pallas_src>

<mosaic_0001>
module attributes {stable_mosaic.version = 11 : i64} {
  func.func @_dct2d_kernel(%arg0: i32, %arg1: memref<1x16x128xf32, #tpu.memory_space<vmem>>, %arg2: memref<16x16xf32, #tpu.memory_space<vmem>>, %arg3: memref<128x128xf32, #tpu.memory_space<vmem>>, %arg4: memref<1x16x128xf32, #tpu.memory_space<vmem>>) attributes {dimension_semantics = [#tpu.dimension_semantics<parallel>], iteration_bounds = array<i64: 1>, scalar_prefetch = 0 : i64, scratch_operands = 0 : i64, tpu.core_type = #tpu.core_type<tc>, window_params = [{transform_indices = @transform_0, window_bounds = array<i64: 1, 16, 128>}, {pipeline_mode = #tpu.pipeline_mode<synchronous>, transform_indices = @transform_1, window_bounds = array<i64: 16, 16>}, {pipeline_mode = #tpu.pipeline_mode<synchronous>, transform_indices = @transform_2, window_bounds = array<i64: 128, 128>}, {transform_indices = @transform_3, window_bounds = array<i64: 1, 16, 128>}]} {
    %c0 = arith.constant 0 : index
    %c0_0 = arith.constant 0 : index
    %c0_1 = arith.constant 0 : index
    %0 = vector.load %arg1[%c0, %c0_0, %c0_1] : memref<1x16x128xf32, #tpu.memory_space<vmem>>, vector<1x16x128xf32>
    %1 = vector.shape_cast %0 : vector<1x16x128xf32> to vector<16x128xf32>
    %c0_2 = arith.constant 0 : index
    %c0_3 = arith.constant 0 : index
    %2 = vector.load %arg3[%c0_2, %c0_3] : memref<128x128xf32, #tpu.memory_space<vmem>>, vector<128x128xf32>
    %cst = arith.constant dense<0.000000e+00> : vector<16x128xf32>
    %3 = tpu.matmul %1, %2, %cst {dimension_numbers = #tpu.dot_dimension_numbers<[1], [0], [0], [1], [0, 0, 1, 1], [], []>} : vector<16x128xf32>, vector<128x128xf32>, vector<16x128xf32> -> vector<16x128xf32>
    %4 = vector.shape_cast %3 : vector<16x128xf32> to vector<1x16x128xf32>
    %c0_4 = arith.constant 0 : index
    %c0_5 = arith.constant 0 : index
    %5 = vector.load %arg2[%c0_4, %c0_5] : memref<16x16xf32, #tpu.memory_space<vmem>>, vector<16x16xf32>
    %cst_6 = arith.constant dense<0.000000e+00> : vector<16x1x128xf32>
    %6 = tpu.matmul %5, %4, %cst_6 {dimension_numbers = #tpu.dot_dimension_numbers<[1], [1], [0], [0, 2], [0, 0, 1, 0, 1, 2], [], []>} : vector<16x16xf32>, vector<1x16x128xf32>, vector<16x1x128xf32> -> vector<16x1x128xf32>
    %7 = tpu.transpose %6, [1, 0, 2] : vector<16x1x128xf32> -> vector<1x16x128xf32>
    %c0_7 = arith.constant 0 : index
    %c0_8 = arith.constant 0 : index
    %c0_9 = arith.constant 0 : index
    %8 = vector.load %arg4[%c0_7, %c0_8, %c0_9] : memref<1x16x128xf32, #tpu.memory_space<vmem>>, vector<1x16x128xf32>
    tpu.vector_store %arg4[%c0_7, %c0_8, %c0_9], %7 {strides = array<i32>} : memref<1x16x128xf32, #tpu.memory_space<vmem>>, vector<1x16x128xf32>,
    return
  }
  func.func @transform_0(%arg0: i32) -> (i32, i32, i32) {
    %c0_i32 = arith.constant 0 : i32
    %c0_i32_0 = arith.constant 0 : i32
    %c0_i32_1 = arith.constant 0 : i32
    return %arg0, %c0_i32, %c0_i32_0 : i32, i32, i32
  }
  func.func @transform_1(%arg0: i32) -> (i32, i32) {
    %c0_i32 = arith.constant 0 : i32
    %c0_i32_0 = arith.constant 0 : i32
    %c0_i32_1 = arith.constant 0 : i32
    return %c0_i32, %c0_i32_0 : i32, i32
  }
  func.func @transform_2(%arg0: i32) -> (i32, i32) {
    %c0_i32 = arith.constant 0 : i32
    %c0_i32_0 = arith.constant 0 : i32
    %c0_i32_1 = arith.constant 0 : i32
    return %c0_i32, %c0_i32_0 : i32, i32
  }
  func.func @transform_3(%arg0: i32) -> (i32, i32, i32) {
    %c0_i32 = arith.constant 0 : i32
    %c0_i32_0 = arith.constant 0 : i32
    %c0_i32_1 = arith.constant 0 : i32
    return %arg0, %c0_i32, %c0_i32_0 : i32, i32, i32
  }
}

</mosaic_0001>

<llo_original>
// kernel: tpu_custom_call.1
$region0: #{tpu_custom_call.1}
  #allocation0 [shape = 'u32[]', space=smem, size = 0x4, offset = 0x4, fixed_abs, tag = 'smem constant byte address 0x4 - core index']
  #allocation1 [shape = 'u32[144,128]{1,0:T(1,128)}', space=vmem, size = 0x12000, scoped, tag = 'internal scratch']
  %s0 = inlined_call_operand.hbm [shape: f32[1,16,128], index: 0, kind: input, shape index: {}]
  %s1 = inlined_call_operand.hbm [shape: f32[16,16], index: 1, kind: input, shape index: {}]
  %s2 = inlined_call_operand.hbm [shape: f32[128,128], index: 2, kind: input, shape index: {}]
  %s3 = inlined_call_operand.hbm [shape: f32[1,16,128], index: 3, kind: output, shape index: {}]
  %s4 = sld [smem:[#allocation0]]
  $region34: #{tpu_custom_call.1} parent=0
    _
  %s6 = ssub.s32 1, %s4
  %s7 = scalar_select 0, %s6, %s4
  $region1: #{tpu_custom_call.1} parent=0
    #allocation2 [shape = 'u8[8192]{0}', space=vmem, size = 0x2000, scoped, tag = 'input window, operand 0, single buffered']
    #allocation3 [shape = 's32[1]{0}', space=sflag, size = 0x4, scoped, tag = 'scoped memory for tpu_custom_call.1']
    #allocation4 [shape = 's32[1]{0}', space=sflag, size = 0x4, scoped, tag = 'scoped memory for tpu_custom_call.1']
    #allocation5 [shape = 'u8[8192]{0}', space=vmem, size = 0x2000, scoped, tag = 'input window, operand 1, single buffered']
    #allocation6 [shape = 's32[1]{0}', space=sflag, size = 0x4, scoped, tag = 'scoped memory for tpu_custom_call.1']
    #allocation7 [shape = 'u8[65536]{0}', space=vmem, size = 0x10000, scoped, tag = 'input window, operand 2, single buffered']
    #allocation8 [shape = 'u8[8192]{0}', space=vmem, size = 0x2000, scoped, tag = 'output window, operand 0, single buffered']
    %8 = vsyncpa [#allocation3], 0
    %9 = vsyncpa [#allocation6], 0
    %10 = vsyncpa [#allocation4], 0
    // Predicated region
    $region2: #{tpu_custom_call.1} parent=1 // pred_check
      _
    $region3: #{tpu_custom_call.1} parent=1 // pred_check_branch
      %12 = sbr.rel (0) target = $region5
    $region4: #{tpu_custom_call.1} parent=1 // pred_region
      %s14 = ssub.s32 256, 256
      %15 = vsyncadd [#allocation3], %s14
      %s16 = sshll.u32 [#allocation2], 4
      %s17 = int_to_ptr.vmem [resolvable:$true] %s16
      %22 = dma.hbm_to_vmem [thread:$0]  %s0, 256, %s17, [#allocation3], 128, 128, 8
    $region5: #{tpu_custom_call.1} parent=1 // pred_fallthru
      _
    // Predicated region
    $region6: #{tpu_custom_call.1} parent=1 // pred_check
      _
    $region7: #{tpu_custom_call.1} parent=1 // pred_check_branch
      %24 = sbr.rel (0) target = $region9
    $region8: #{tpu_custom_call.1} parent=1 // pred_region
      %s26 = ssub.s32 256, 256
      %27 = vsyncadd [#allocation6], %s26
      %s28 = sshll.u32 [#allocation5], 4
      %s29 = int_to_ptr.vmem [resolvable:$true] %s28
      %34 = dma.hbm_to_vmem [thread:$0]  %s1, 256, %s29, [#allocation6], 128, 128, 8
    $region9: #{tpu_custom_call.1} parent=1 // pred_fallthru
      _
    // Predicated region
    $region10: #{tpu_custom_call.1} parent=1 // pred_check
      _
    $region11: #{tpu_custom_call.1} parent=1 // pred_check_branch
      %36 = sbr.rel (0) target = $region13
    $region12: #{tpu_custom_call.1} parent=1 // pred_region
      %s38 = ssub.s32 2048, 2048
      %39 = vsyncadd [#allocation6], %s38
      %s40 = sshll.u32 [#allocation7], 4
      %s41 = int_to_ptr.vmem [resolvable:$true] %s40
      %46 = dma.hbm_to_vmem [thread:$0]  %s2, 2048, %s41, [#allocation6], 128, 128, 8
    $region13: #{tpu_custom_call.1} parent=1 // pred_fallthru
      _
    // Predicated region
    $region14: #{tpu_custom_call.1} parent=1 // pred_check
      _
    $region15: #{tpu_custom_call.1} parent=1 // pred_check_branch
      %48 = sbr.rel (0) target = $region17
    $region16: #{tpu_custom_call.1} parent=1 // pred_region
      %49 = dma.done [#allocation3], 256
    $region17: #{tpu_custom_call.1} parent=1 // pred_fallthru
      _
    // Predicated region
    $region18: #{tpu_custom_call.1} parent=1 // pred_check
      _
    $region19: #{tpu_custom_call.1} parent=1 // pred_check_branch
      %51 = sbr.rel (0) target = $region21
    $region20: #{tpu_custom_call.1} parent=1 // pred_region
      %52 = dma.done [#allocation6], 256
    $region21: #{tpu_custom_call.1} parent=1 // pred_fallthru
      _
    // Predicated region
    $region22: #{tpu_custom_call.1} parent=1 // pred_check
      _
    $region23: #{tpu_custom_call.1} parent=1 // pred_check_branch
      %54 = sbr.rel (0) target = $region25
    $region24: #{tpu_custom_call.1} parent=1 // pred_region
      %55 = dma.done [#allocation6], 2048
    $region25: #{tpu_custom_call.1} parent=1 // pred_fallthru
      _
    %v56 = vld [vmem:[#allocation2] sm:$0xff]
    %v57 = vld [vmem:[#allocation2 + $0x8] sm:$0xff]
    %v58 = vld [vmem:[#allocation7] sm:$0xff]
    %v59 = vld [vmem:[#allocation7 + $0x8] sm:$0xff]
    %v60 = vld [vmem:[#allocation7 + $0x10] sm:$0xff]
    %v61 = vld [vmem:[#allocation7 + $0x18] sm:$0xff]
    %v62 = vld [vmem:[#allocation7 + $0x20] sm:$0xff]
    %v63 = vld [vmem:[#allocation7 + $0x28] sm:$0xff]
    %v64 = vld [vmem:[#allocation7 + $0x30] sm:$0xff]
    %v65 = vld [vmem:[#allocation7 + $0x38] sm:$0xff]
    %v66 = vld [vmem:[#allocation7 + $0x40] sm:$0xff]
    %v67 = vld [vmem:[#allocation7 + $0x48] sm:$0xff]
    %v68 = vld [vmem:[#allocation7 + $0x50] sm:$0xff]
    %v69 = vld [vmem:[#allocation7 + $0x58] sm:$0xff]
    %v70 = vld [vmem:[#allocation7 + $0x60] sm:$0xff]
    %v71 = vld [vmem:[#allocation7 + $0x68] sm:$0xff]
    %v72 = vld [vmem:[#allocation7 + $0x70] sm:$0xff]
    %v73 = vld [vmem:[#allocation7 + $0x78] sm:$0xff]
    %74 = vmatprep.subr.mxu0 0.0
    %75 = vmatpush1.msra.mxu0 %v58
    %76 = vmatprep.subr.mxu0 0.0
    %77 = vmatpush1.msra.mxu0 %v59
    %78 = vmatprep.subr.mxu0 0.0
    %79 = vmatpush1.msra.mxu0 %v60
    %80 = vmatprep.subr.mxu0 0.0
    %81 = vmatpush1.msra.mxu0 %v61
    %82 = vmatprep.subr.mxu0 0.0
    %83 = vmatpush1.msra.mxu0 %v62
    %84 = vmatprep.subr.mxu0 0.0
    %85 = vmatpush1.msra.mxu0 %v63
    %86 = vmatprep.subr.mxu0 0.0
    %87 = vmatpush1.msra.mxu0 %v64
    %88 = vmatprep.subr.mxu0 0.0
    %89 = vmatpush1.msra.mxu0 %v65
    %90 = vmatprep.subr.mxu0 0.0
    %91 = vmatpush1.msra.mxu0 %v66
    %92 = vmatprep.subr.mxu0 0.0
    %93 = vmatpush1.msra.mxu0 %v67
    %94 = vmatprep.subr.mxu0 0.0
    %95 = vmatpush1.msra.mxu0 %v68
    %96 = vmatprep.subr.mxu0 0.0
    %97 = vmatpush1.msra.mxu0 %v69
    %98 = vmatprep.subr.mxu0 0.0
    %99 = vmatpush1.msra.mxu0 %v70
    %100 = vmatprep.subr.mxu0 0.0
    %101 = vmatpush1.msra.mxu0 %v71
    %102 = vmatprep.subr.mxu0 0.0
    %103 = vmatpush1.msra.mxu0 %v72
    %104 = vmatprep.subr.mxu0 0.0
    %105 = vmatpush1.msra.mxu0 %v73
    %106 = vmatprep.subr.mxu0 0.0
    %107 = vmatpush1.msra.mxu0 0.0
    %108 = vmatprep.subr.mxu0 0.0
    %109 = vmatpush1.msra.mxu0 0.0
    %110 = vmatprep.subr.mxu0 0.0
    %111 = vmatpush1.msra.mxu0 0.0
    %112 = vmatprep.subr.mxu0 0.0
    %113 = vmatpush1.msra.mxu0 0.0
    %114 = vmatprep.subr.mxu0 0.0
    %115 = vmatpush1.msra.mxu0 0.0
    %116 = vmatprep.subr.mxu0 0.0
    %117 = vmatpush1.msra.mxu0 0.0
    %118 = vmatprep.subr.mxu0 0.0
    %119 = vmatpush1.msra.mxu0 0.0
    %120 = vmatprep.subr.mxu0 0.0
    %121 = vmatpush1.msra.mxu0 0.0
    %122 = vmatprep.subr.mxu0 0.0
    %123 = vmatpush1.msra.mxu0 0.0
    %124 = vmatprep.subr.mxu0 0.0
    %125 = vmatpush1.msra.mxu0 0.0
    %126 = vmatprep.subr.mxu0 0.0
    %127 = vmatpush1.msra.mxu0 0.0
    %128 = vmatprep.subr.mxu0 0.0
    %129 = vmatpush1.msra.mxu0 0.0
    %130 = vmatprep.subr.mxu0 0.0
    %131 = vmatpush1.msra.mxu0 0.0
    %132 = vmatprep.subr.mxu0 0.0
    %133 = vmatpush1.msra.mxu0 0.0
    %134 = vmatprep.subr.mxu0 0.0
    %135 = vmatpush1.msra.mxu0 0.0
    %136 = vmatprep.subr.mxu0 0.0
    %137 = vmatpush1.msra.mxu0 0.0
    %138 = vmatprep.mubr.f32.mxu0 0.0
    %139 = vmatmul.mubr.f32.gmra.mrb[0].mxu0 %v56
    %v140 = vpop.f32.mrb[0].mxu0
    %v141 = vadd.f32 0.0, %v140
    %v142 = vpop.f32.mrb[0].mxu0
    %143 = vmatprep.mubr.f32.mxu0 0.0
    %144 = vmatmul.mubr.f32.gmra.mrb[0].mxu0 %v57
    %v145 = vpop.f32.mrb[0].mxu0
    %v146 = vadd.f32 0.0, %v145
    %v147 = vpop.f32.mrb[0].mxu0
    %148 = vdwg.mxu0
    %v149 = vld [vmem:[#allocation5] sm:$0xff]
    %v150 = vld [vmem:[#allocation5 + $0x8] sm:$0xff]
    %v151 = vcombine.high %v141, 0.0
    %v153 = vunpack.c.l.s4 1983009808
    %v154 = vunpack.c.0.s8 %v153
    %v155 = vlaneseq
    %v156 = vshrl.u32 %v155, 7
    %v157 = vsub.s32 %v154, %v156
    %v158 = vrot.slane %v141, %v157
    %v160 = vunpack.c.l.s4 1983009808
    %v161 = vunpack.c.0.s8 %v160
    %v162 = vlaneseq
    %v163 = vshrl.u32 %v162, 7
    %v164 = vsub.s32 %v161, %v163
    %v165 = vrot.slane %v151, %v164
    %v166 = vcombine.high %v158, 0.0
    %v168 = vunpack.c.l.s4 1934713408
    %v169 = vunpack.c.0.s8 %v168
    %v170 = vlaneseq
    %v171 = vshrl.u32 %v170, 7
    %v172 = vsub.s32 %v169, %v171
    %v173 = vrot.slane %v158, %v172
    %v175 = vunpack.c.l.s4 1934713408
    %v176 = vunpack.c.0.s8 %v175
    %v177 = vlaneseq
    %v178 = vshrl.u32 %v177, 7
    %v179 = vsub.s32 %v176, %v178
    %v180 = vrot.slane %v166, %v179
    %v181 = vcombine.high %v165, 0.0
    %v183 = vunpack.c.l.s4 1934713408
    %v184 = vunpack.c.0.s8 %v183
    %v185 = vlaneseq
    %v186 = vshrl.u32 %v185, 7
    %v187 = vsub.s32 %v184, %v186
    %v188 = vrot.slane %v165, %v187
    %v190 = vunpack.c.l.s4 1934713408
    %v191 = vunpack.c.0.s8 %v190
    %v192 = vlaneseq
    %v193 = vshrl.u32 %v192, 7
    %v194 = vsub.s32 %v191, %v193
    %v195 = vrot.slane %v181, %v194
    %v196 = vcombine.high %v173, 0.0
    %v197 = vcombine.high %v180, 0.0
    %v198 = vcombine.high %v188, 0.0
    %v199 = vcombine.high %v195, 0.0
    %v200 = vcombine.high %v146, 0.0
    %v202 = vunpack.c.l.s4 1983009808
    %v203 = vunpack.c.0.s8 %v202
    %v204 = vlaneseq
    %v205 = vshrl.u32 %v204, 7
    %v206 = vsub.s32 %v203, %v205
    %v207 = vrot.slane %v146, %v206
    %v209 = vunpack.c.l.s4 1983009808
    %v210 = vunpack.c.0.s8 %v209
    %v211 = vlaneseq
    %v212 = vshrl.u32 %v211, 7
    %v213 = vsub.s32 %v210, %v212
    %v214 = vrot.slane %v200, %v213
    %v215 = vcombine.high %v207, 0.0
    %v217 = vunpack.c.l.s4 1934713408
    %v218 = vunpack.c.0.s8 %v217
    %v219 = vlaneseq
    %v220 = vshrl.u32 %v219, 7
    %v221 = vsub.s32 %v218, %v220
    %v222 = vrot.slane %v207, %v221
    %v224 = vunpack.c.l.s4 1934713408
    %v225 = vunpack.c.0.s8 %v224
    %v226 = vlaneseq
    %v227 = vshrl.u32 %v226, 7
    %v228 = vsub.s32 %v225, %v227
    %v229 = vrot.slane %v215, %v228
    %v230 = vcombine.high %v214, 0.0
    %v232 = vunpack.c.l.s4 1934713408
    %v233 = vunpack.c.0.s8 %v232
    %v234 = vlaneseq
    %v235 = vshrl.u32 %v234, 7
    %v236 = vsub.s32 %v233, %v235
    %v237 = vrot.slane %v214, %v236
    %v239 = vunpack.c.l.s4 1934713408
    %v240 = vunpack.c.0.s8 %v239
    %v241 = vlaneseq
    %v242 = vshrl.u32 %v241, 7
    %v243 = vsub.s32 %v240, %v242
    %v244 = vrot.slane %v230, %v243
    %v245 = vcombine.high %v222, 0.0
    %v246 = vcombine.high %v229, 0.0
    %v247 = vcombine.high %v237, 0.0
    %v248 = vcombine.high %v244, 0.0
    %v265 = vrot.slane %v196, 7
    %vm266 = vcmask 1041409
    %v267 = vsel %vm266, %v265, %v173
    %v268 = vrot.slane %v180, 6
    %vm269 = vcmask 1042434
    %v270 = vsel %vm269, %v268, %v267
    %v271 = vrot.slane %v197, 5
    %vm272 = vcmask 1043459
    %v273 = vsel %vm272, %v271, %v270
    %v274 = vrot.slane %v188, 4
    %vm275 = vcmask 1044484
    %v276 = vsel %vm275, %v274, %v273
    %v277 = vrot.slane %v198, 3
    %vm278 = vcmask 1045509
    %v279 = vsel %vm278, %v277, %v276
    %v280 = vrot.slane %v195, 2
    %vm281 = vcmask 1046534
    %v282 = vsel %vm281, %v280, %v279
    %v283 = vrot.slane %v199, 1
    %vm284 = vcmask 1047559
    %v285 = vsel %vm284, %v283, %v282
    %v286 = vrot.slane %v245, 7
    %v287 = vsel %vm266, %v286, %v222
    %v288 = vrot.slane %v229, 6
    %v289 = vsel %vm269, %v288, %v287
    %v290 = vrot.slane %v246, 5
    %v291 = vsel %vm272, %v290, %v289
    %v292 = vrot.slane %v237, 4
    %v293 = vsel %vm275, %v292, %v291
    %v294 = vrot.slane %v247, 3
    %v295 = vsel %vm278, %v294, %v293
    %v296 = vrot.slane %v244, 2
    %v297 = vsel %vm281, %v296, %v295
    %v298 = vrot.slane %v248, 1
    %v299 = vsel %vm284, %v298, %v297
    %vm302 = vcmask 130048
    %v304 = vsel %vm302, %v149, 0
    %v307 = vsel %vm302, %v150, 0
    %309 = vmatprep.subr.mxu0 0.0
    %310 = vmatpush1.msra.mxu0 %v285
    %311 = vmatprep.subr.mxu0 0.0
    %312 = vmatpush1.msra.mxu0 %v299
    %313 = vmatprep.subr.mxu0 0.0
    %314 = vmatpush1.msra.mxu0 0.0
    %315 = vmatprep.subr.mxu0 0.0
    %316 = vmatpush1.msra.mxu0 0.0
    %317 = vmatprep.subr.mxu0 0.0
    %318 = vmatpush1.msra.mxu0 0.0
    %319 = vmatprep.subr.mxu0 0.0
    %320 = vmatpush1.msra.mxu0 0.0
    %321 = vmatprep.subr.mxu0 0.0
    %322 = vmatpush1.msra.mxu0 0.0
    %323 = vmatprep.subr.mxu0 0.0
    %324 = vmatpush1.msra.mxu0 0.0
    %325 = vmatprep.subr.mxu0 0.0
    %326 = vmatpush1.msra.mxu0 0.0
    %327 = vmatprep.subr.mxu0 0.0
    %328 = vmatpush1.msra.mxu0 0.0
    %329 = vmatprep.subr.mxu0 0.0
    %330 = vmatpush1.msra.mxu0 0.0
    %331 = vmatprep.subr.mxu0 0.0
    %332 = vmatpush1.msra.mxu0 0.0
    %333 = vmatprep.subr.mxu0 0.0
    %334 = vmatpush1.msra.mxu0 0.0
    %335 = vmatprep.subr.mxu0 0.0
    %336 = vmatpush1.msra.mxu0 0.0
    %337 = vmatprep.subr.mxu0 0.0
    %338 = vmatpush1.msra.mxu0 0.0
    %339 = vmatprep.subr.mxu0 0.0
    %340 = vmatpush1.msra.mxu0 0.0
    %341 = vmatprep.subr.mxu0 0.0
    %342 = vmatpush1.msra.mxu0 0.0
    %343 = vmatprep.subr.mxu0 0.0
    %344 = vmatpush1.msra.mxu0 0.0
    %345 = vmatprep.subr.mxu0 0.0
    %346 = vmatpush1.msra.mxu0 0.0
    %347 = vmatprep.subr.mxu0 0.0
    %348 = vmatpush1.msra.mxu0 0.0
    %349 = vmatprep.subr.mxu0 0.0
    %350 = vmatpush1.msra.mxu0 0.0
    %351 = vmatprep.subr.mxu0 0.0
    %352 = vmatpush1.msra.mxu0 0.0
    %353 = vmatprep.subr.mxu0 0.0
    %354 = vmatpush1.msra.mxu0 0.0
    %355 = vmatprep.subr.mxu0 0.0
    %356 = vmatpush1.msra.mxu0 0.0
    %357 = vmatprep.subr.mxu0 0.0
    %358 = vmatpush1.msra.mxu0 0.0
    %359 = vmatprep.subr.mxu0 0.0
    %360 = vmatpush1.msra.mxu0 0.0
    %361 = vmatprep.subr.mxu0 0.0
    %362 = vmatpush1.msra.mxu0 0.0
    %363 = vmatprep.subr.mxu0 0.0
    %364 = vmatpush1.msra.mxu0 0.0
    %365 = vmatprep.subr.mxu0 0.0
    %366 = vmatpush1.msra.mxu0 0.0
    %367 = vmatprep.subr.mxu0 0.0
    %368 = vmatpush1.msra.mxu0 0.0
    %369 = vmatprep.subr.mxu0 0.0
    %370 = vmatpush1.msra.mxu0 0.0
    %371 = vmatprep.subr.mxu0 0.0
    %372 = vmatpush1.msra.mxu0 0.0
    %373 = vmatprep.mubr.f32.mxu0 0.0
    %374 = vmatmul.mubr.f32.gmra.mrb[0].mxu0 %v304
    %v375 = vpop.f32.mrb[0].mxu0
    %v376 = vadd.f32 0.0, %v375
    %v377 = vpop.f32.mrb[0].mxu0
    %378 = vmatprep.mubr.f32.mxu0 0.0
    %379 = vmatmul.mubr.f32.gmra.mrb[0].mxu0 %v307
    %v380 = vpop.f32.mrb[0].mxu0
    %v381 = vadd.f32 0.0, %v380
    %v382 = vpop.f32.mrb[0].mxu0
    %383 = vdwg.mxu0
    %v386 = vcombine.high %v376, %v376
    %v388 = vunpack.c.l.s4 1966171168
    %v389 = vunpack.c.0.s8 %v388
    %v390 = vlaneseq
    %v391 = vshrl.u32 %v390, 7
    %v392 = vsub.s32 %v389, %v391
    %v393 = vrot.slane %v376, %v392
    %v395 = vunpack.c.l.s4 1966171168
    %v396 = vunpack.c.0.s8 %v395
    %v397 = vlaneseq
    %v398 = vshrl.u32 %v397, 7
    %v399 = vsub.s32 %v396, %v398
    %v400 = vrot.slane %v386, %v399
    %v401 = vcombine.high %v393, %v393
    %v402 = vcombine.high %v400, %v400
    %v404 = vunpack.c.l.s4 1966171168
    %v405 = vunpack.c.0.s8 %v404
    %v406 = vlaneseq
    %v407 = vshrl.u32 %v406, 7
    %v408 = vsub.s32 %v405, %v407
    %v409 = vrot.slane %v393, %v408
    %v411 = vunpack.c.l.s4 1966171168
    %v412 = vunpack.c.0.s8 %v411
    %v413 = vlaneseq
    %v414 = vshrl.u32 %v413, 7
    %v415 = vsub.s32 %v412, %v414
    %v416 = vrot.slane %v400, %v415
    %v418 = vunpack.c.l.s4 1966171168
    %v419 = vunpack.c.0.s8 %v418
    %v420 = vlaneseq
    %v421 = vshrl.u32 %v420, 7
    %v422 = vsub.s32 %v419, %v421
    %v423 = vrot.slane %v401, %v422
    %v425 = vunpack.c.l.s4 1966171168
    %v426 = vunpack.c.0.s8 %v425
    %v427 = vlaneseq
    %v428 = vshrl.u32 %v427, 7
    %v429 = vsub.s32 %v426, %v428
    %v430 = vrot.slane %v402, %v429
    %v431 = vcombine.high %v409, %v409
    %v432 = vcombine.high %v416, %v416
    %v433 = vcombine.high %v423, %v423
    %v434 = vcombine.high %v430, %v430
    %v435 = vcombine.high %v381, %v381
    %v437 = vunpack.c.l.s4 1966171168
    %v438 = vunpack.c.0.s8 %v437
    %v439 = vlaneseq
    %v440 = vshrl.u32 %v439, 7
    %v441 = vsub.s32 %v438, %v440
    %v442 = vrot.slane %v381, %v441
    %v444 = vunpack.c.l.s4 1966171168
    %v445 = vunpack.c.0.s8 %v444
    %v446 = vlaneseq
    %v447 = vshrl.u32 %v446, 7
    %v448 = vsub.s32 %v445, %v447
    %v449 = vrot.slane %v435, %v448
    %v450 = vcombine.high %v442, %v442
    %v451 = vcombine.high %v449, %v449
    %v453 = vunpack.c.l.s4 1966171168
    %v454 = vunpack.c.0.s8 %v453
    %v455 = vlaneseq
    %v456 = vshrl.u32 %v455, 7
    %v457 = vsub.s32 %v454, %v456
    %v458 = vrot.slane %v442, %v457
    %v460 = vunpack.c.l.s4 1966171168
    %v461 = vunpack.c.0.s8 %v460
    %v462 = vlaneseq
    %v463 = vshrl.u32 %v462, 7
    %v464 = vsub.s32 %v461, %v463
    %v465 = vrot.slane %v449, %v464
    %v467 = vunpack.c.l.s4 1966171168
    %v468 = vunpack.c.0.s8 %v467
    %v469 = vlaneseq
    %v470 = vshrl.u32 %v469, 7
    %v471 = vsub.s32 %v468, %v470
    %v472 = vrot.slane %v450, %v471
    %v474 = vunpack.c.l.s4 1966171168
    %v475 = vunpack.c.0.s8 %v474
    %v476 = vlaneseq
    %v477 = vshrl.u32 %v476, 7
    %v478 = vsub.s32 %v475, %v477
    %v479 = vrot.slane %v451, %v478
    %v480 = vcombine.high %v458, %v458
    %v481 = vcombine.high %v465, %v465
    %v482 = vcombine.high %v472, %v472
    %v483 = vcombine.high %v479, %v479
    %v484 = vcombine.low %v409, %v423
    %v485 = vcombine.low %v431, %v433
    %v486 = vcombine.low %v416, %v430
    %v487 = vcombine.low %v432, %v434
    %v489 = vunpack.c.l.s4 1966171168
    %v490 = vunpack.c.0.s8 %v489
    %v491 = vlaneseq
    %v492 = vshrl.u32 %v491, 7
    %v493 = vsub.s32 %v490, %v492
    %v494 = vrot.slane %v484, %v493
    %v496 = vunpack.c.l.s4 1966171168
    %v497 = vunpack.c.0.s8 %v496
    %v498 = vlaneseq
    %v499 = vshrl.u32 %v498, 7
    %v500 = vsub.s32 %v497, %v499
    %v501 = vrot.slane %v485, %v500
    %v503 = vunpack.c.l.s4 1966171168
    %v504 = vunpack.c.0.s8 %v503
    %v505 = vlaneseq
    %v506 = vshrl.u32 %v505, 7
    %v507 = vsub.s32 %v504, %v506
    %v508 = vrot.slane %v486, %v507
    %v510 = vunpack.c.l.s4 1966171168
    %v511 = vunpack.c.0.s8 %v510
    %v512 = vlaneseq
    %v513 = vshrl.u32 %v512, 7
    %v514 = vsub.s32 %v511, %v513
    %v515 = vrot.slane %v487, %v514
    %v516 = vcombine.low %v494, %v501
    %v517 = vcombine.low %v508, %v515
    %v519 = vunpack.c.l.s4 1966171168
    %v520 = vunpack.c.0.s8 %v519
    %v521 = vlaneseq
    %v522 = vshrl.u32 %v521, 7
    %v523 = vsub.s32 %v520, %v522
    %v524 = vrot.slane %v516, %v523
    %v526 = vunpack.c.l.s4 1966171168
    %v527 = vunpack.c.0.s8 %v526
    %v528 = vlaneseq
    %v529 = vshrl.u32 %v528, 7
    %v530 = vsub.s32 %v527, %v529
    %v531 = vrot.slane %v517, %v530
    %v532 = vcombine.low %v524, %v531
    %v533 = vcombine.low %v458, %v472
    %v534 = vcombine.low %v480, %v482
    %v535 = vcombine.low %v465, %v479
    %v536 = vcombine.low %v481, %v483
    %v538 = vunpack.c.l.s4 1966171168
    %v539 = vunpack.c.0.s8 %v538
    %v540 = vlaneseq
    %v541 = vshrl.u32 %v540, 7
    %v542 = vsub.s32 %v539, %v541
    %v543 = vrot.slane %v533, %v542
    %v545 = vunpack.c.l.s4 1966171168
    %v546 = vunpack.c.0.s8 %v545
    %v547 = vlaneseq
    %v548 = vshrl.u32 %v547, 7
    %v549 = vsub.s32 %v546, %v548
    %v550 = vrot.slane %v534, %v549
    %v552 = vunpack.c.l.s4 1966171168
    %v553 = vunpack.c.0.s8 %v552
    %v554 = vlaneseq
    %v555 = vshrl.u32 %v554, 7
    %v556 = vsub.s32 %v553, %v555
    %v557 = vrot.slane %v535, %v556
    %v559 = vunpack.c.l.s4 1966171168
    %v560 = vunpack.c.0.s8 %v559
    %v561 = vlaneseq
    %v562 = vshrl.u32 %v561, 7
    %v563 = vsub.s32 %v560, %v562
    %v564 = vrot.slane %v536, %v563
    %v565 = vcombine.low %v543, %v550
    %v566 = vcombine.low %v557, %v564
    %v568 = vunpack.c.l.s4 1966171168
    %v569 = vunpack.c.0.s8 %v568
    %v570 = vlaneseq
    %v571 = vshrl.u32 %v570, 7
    %v572 = vsub.s32 %v569, %v571
    %v573 = vrot.slane %v565, %v572
    %v575 = vunpack.c.l.s4 1966171168
    %v576 = vunpack.c.0.s8 %v575
    %v577 = vlaneseq
    %v578 = vshrl.u32 %v577, 7
    %v579 = vsub.s32 %v576, %v578
    %v580 = vrot.slane %v566, %v579
    %v581 = vcombine.low %v573, %v580
    %584 = vst [vmem:[#allocation8] sm:$0xff] %v532
    %585 = vst [vmem:[#allocation8 + $0x8] sm:$0xff] %v581
    // Predicated region
    $region26: #{tpu_custom_call.1} parent=1 // pred_check
      _
    $region27: #{tpu_custom_call.1} parent=1 // pred_check_branch
      %587 = sbr.rel (0) target = $region29
    $region28: #{tpu_custom_call.1} parent=1 // pred_region
      %s589 = ssub.s32 256, 256
      %590 = vsyncadd [#allocation4], %s589
      %s591 = sshll.u32 [#allocation8], 4
      %s592 = int_to_ptr.vmem [resolvable:$true] %s591
      %597 = dma.vmem_to_hbm [thread:$0]  %s592, 256, %s3, [#allocation4], 128, 128, 8
    $region29: #{tpu_custom_call.1} parent=1 // pred_fallthru
      _
    // Predicated region
    $region30: #{tpu_custom_call.1} parent=1 // pred_check
      _
    $region31: #{tpu_custom_call.1} parent=1 // pred_check_branch
      %599 = sbr.rel (0) target = $region33
    $region32: #{tpu_custom_call.1} parent=1 // pred_region
      %600 = dma.done [#allocation4], 256
    $region33: #{tpu_custom_call.1} parent=1 // pred_fallthru
      _
    %601 = vsyncpa [#allocation3], 1
    %602 = vsyncpa [#allocation6], 1
    %603 = vsyncpa [#allocation4], 1

</llo_original>
